<compile_context>
chip_gen: v6e
topology: v6e:2x2x1
jax: 0.10.0
libtpu: 0.0.40
codegen_flags: <defaults>
</compile_context>

<pallas_src>
import jax
import jax.numpy as jnp
from jax.experimental import pallas as pl
from jax.experimental.pallas import tpu as pltpu


def _cdiv(a, b):
    return -(-a // b)


def _round_up(x, m):
    return ((x + m - 1) // m) * m


def _resident_spec(block_shape, index_map):
    """Grid-invariant weight/bias block: single-buffered when supported."""
    if hasattr(pl, "Buffered"):
        try:
            return pl.BlockSpec(block_shape, index_map,
                                pipeline_mode=pl.Buffered(1))
        except TypeError:
            pass
    return pl.BlockSpec(block_shape, index_map)


def decoder_mlp_kernel(qx_ref, b1t_ref, w1x_ref, w2_ref, b2_ref, o_ref):
    # qx_ref:  (T_tile, q_tile, F)        query rows (compute_dtype)
    # b1t_ref: (T_tile, 1, H_p)   f32     per-task bias = rep @ W1_rep + b1
    # w1x_ref: (F, H_p)                   first-layer weights (query part)
    # w2_ref:  (H_p, O_p)                 second-layer weights
    # b2_ref:  (1, O_p)           f32
    # o_ref:   (T_tile, q_tile, O_p)
    t_tile, q_tile, feat = qx_ref.shape
    d_out_p = o_ref.shape[-1]
    rows = t_tile * q_tile

    # Layer 1: one big matmul with M = T_tile * q_tile (reshape is layout-free
    # because q_tile is sublane-aligned).  Fused concat == x@W1_x + b1_task.
    x2d = qx_ref[...].reshape(rows, feat)
    h = jnp.dot(x2d, w1x_ref[...], preferred_element_type=jnp.float32)
    h = h.reshape(t_tile, q_tile, -1) + b1t_ref[...]          # f32 bias add
    h = jnp.maximum(h, 0.0)                                   # ReLU

    # Layer 2 (no final activation).
    h2d = h.reshape(rows, -1).astype(w2_ref.dtype)
    o = jnp.dot(h2d, w2_ref[...], preferred_element_type=jnp.float32)
    o = o + b2_ref[...]
    o_ref[...] = o.reshape(t_tile, q_tile, d_out_p).astype(o_ref.dtype)


def decoder_forward(query_x, representation, params, *,
                    max_q_tile=512,
                    compute_dtype=jnp.bfloat16,
                    pad_output_lanes=True,
                    vmem_budget_bytes=32 << 20):
    """Pallas implementation of Decoder.forward.

    compute_dtype=jnp.bfloat16 (default): MXU-rate operands, f32 accumulation.
    compute_dtype=jnp.float32: exact parity with the f32 reference.
    """
    w1, b1, w2, b2 = params
    task_batch, q_size, feat_dim = query_x.shape
    rep_dim = representation.shape[-1]
    d_in = rep_dim + feat_dim
    assert w1.shape[0] == d_in, "W1 rows must equal rep_dim + feature_dim"
    d_hid = w1.shape[1]
    d_out = w2.shape[1]
    out_dtype = query_x.dtype

    # ---- Fold the representation path into a per-task bias (plain XLA) ----
    #   concat([rep, x]) @ W1 + b1  ==  x @ W1_x + (rep @ W1_rep + b1)
    w1_rep = w1[:rep_dim, :].astype(jnp.float32)
    w1_x = w1[rep_dim:, :]
    b1_task = representation.astype(jnp.float32) @ w1_rep + b1.astype(jnp.float32)

    # ---- Lane-dense padding: hidden (always) and output (optional) --------
    d_hid_p = _round_up(d_hid, 128)
    d_out_p = _round_up(d_out, 128) if pad_output_lanes else d_out
    if d_hid_p != d_hid:
        w1_x = jnp.pad(w1_x, ((0, 0), (0, d_hid_p - d_hid)))
        b1_task = jnp.pad(b1_task, ((0, 0), (0, d_hid_p - d_hid)))
        w2 = jnp.pad(w2, ((0, d_hid_p - d_hid), (0, 0)))
    if d_out_p != d_out:
        # NOTE: on bandwidth-limited v5e with tiny d_out, pad_output_lanes=False
        # trades masked stores for 4x less output HBM writeback.
        w2 = jnp.pad(w2, ((0, 0), (0, d_out_p - d_out)))
        b2 = jnp.pad(b2, ((0, d_out_p - d_out),))
    b1_task3 = b1_task.reshape(task_batch, 1, d_hid_p).astype(jnp.float32)
    b2_2d = b2.reshape(1, d_out_p).astype(jnp.float32)

    in_bytes = jnp.dtype(compute_dtype).itemsize
    out_bytes = jnp.dtype(out_dtype).itemsize
    row_align = 8 if in_bytes == 4 else 16        # sublane packing (f32 / bf16)

    # ---- Balanced query-row chunking (padding waste bounded by < 1 tile) --
    q_chunks = max(1, _cdiv(q_size, max_q_tile))
    q_tile = _round_up(_cdiv(q_size, q_chunks), row_align)
    q_pad = q_tile * q_chunks

    # ---- Task tiling under a VMEM budget; keep >=2 grid steps if possible
    #      so both v7x TensorCores get work. ---------------------------------
    if q_chunks >= 2 or task_batch < 2:
        t_cap = task_batch
    else:
        t_cap = max(1, _cdiv(task_batch, 2))

    # Conservative estimate (weights counted double-buffered in case the
    # single-buffer pipeline_mode fallback is taken).
    resident_bytes = 2 * ((feat_dim * d_hid_p + d_hid_p * d_out_p) * in_bytes
                          + d_out_p * 4)

    def vmem_estimate(t):
        return (2 * t * q_tile * feat_dim * in_bytes      # qx tiles (x2 buffers)
                + 2 * t * d_hid_p * 4                     # per-task bias tiles
                + 2 * t * q_tile * d_out_p * out_bytes    # output tiles
                + t * q_tile * d_hid_p * 4                # hidden activation
                + resident_bytes)

    t_tile = 1
    for t in range(t_cap, 0, -1):
        if task_batch % t == 0 and vmem_estimate(t) <= vmem_budget_bytes:
            t_tile = t
            break

    # ---- Pad / cast inputs --------------------------------------------------
    qx = query_x
    if q_pad != q_size:
        # Padded rows are zeros and are sliced off the output below.
        # TODO(synk): for very large query sets, mask the tail chunk in-kernel
        # instead of materializing a padded HBM copy of query_x.
        qx = jnp.pad(qx, ((0, 0), (0, q_pad - q_size), (0, 0)))
    if qx.dtype != compute_dtype:
        qx = qx.astype(compute_dtype)
    w1_x_c = w1_x.astype(compute_dtype)
    w2_c = w2.astype(compute_dtype)

    grid = (task_batch // t_tile, q_pad // q_tile)
    est = vmem_estimate(t_tile)
    vmem_limit = int(min(48 << 20, max(32 << 20, 2 * est)))

    out_p = pl.pallas_call(
        decoder_mlp_kernel,
        out_shape=jax.ShapeDtypeStruct((task_batch, q_pad, d_out_p), out_dtype),
        grid_spec=pltpu.PrefetchScalarGridSpec(
            num_scalar_prefetch=0,
            grid=grid,
            in_specs=[
                # per-(task-tile, q-chunk) query rows
                pl.BlockSpec((t_tile, q_tile, feat_dim),
                             lambda t, qi: (t, qi, 0)),
                # per-task-tile folded bias (rep @ W1_rep + b1)
                pl.BlockSpec((t_tile, 1, d_hid_p),
                             lambda t, qi: (t, 0, 0)),
                # grid-invariant weights / bias: resident, single-buffered
                _resident_spec((feat_dim, d_hid_p), lambda t, qi: (0, 0)),
                _resident_spec((d_hid_p, d_out_p), lambda t, qi: (0, 0)),
                _resident_spec((1, d_out_p), lambda t, qi: (0, 0)),
            ],
            out_specs=pl.BlockSpec((t_tile, q_tile, d_out_p),
                                   lambda t, qi: (t, qi, 0)),
        ),
        compiler_params=pltpu.CompilerParams(
            dimension_semantics=("parallel", "parallel"),
            vmem_limit_bytes=vmem_limit,
        ),
    )(qx, b1_task3, w1_x_c, w2_c, b2_2d)

    return out_p[:, :q_size, :d_out]


def decoder_reference(query_x, representation, params):
    """Pure-JAX reference for validation."""
    w1, b1, w2, b2 = params
    task_batch, q_size, _ = query_x.shape
    rep_rep = jnp.broadcast_to(
        representation[:, None, :],
        (task_batch, q_size, representation.shape[-1]),
    )
    x = jnp.concatenate([rep_rep, query_x], axis=-1)
    h = jnp.maximum(x @ w1 + b1, 0.0)
    return h @ w2 + b2


def init_params(key, sizes):
    """Deterministic init of the MLP(sizes) parameters (2 Linear layers)."""
    assert len(sizes) == 3
    k1, k2 = jax.random.split(key)
    d_in, d_hid, d_out = sizes
    w1 = (jax.random.normal(k1, (d_in, d_hid), jnp.float32)
          / jnp.sqrt(jnp.float32(d_in)))
    b1 = jnp.zeros((d_hid,), jnp.float32)
    w2 = (jax.random.normal(k2, (d_hid, d_out), jnp.float32)
          / jnp.sqrt(jnp.float32(d_hid)))
    b2 = jnp.zeros((d_out,), jnp.float32)
    return w1, b1, w2, b2


if __name__ == "__main__":
    # Small shapes consistent with the module's forward.
    task_batch = 2
    query_set_size = 8
    feature_dim = 16
    rep_dim = 16
    sizes = [rep_dim + feature_dim, 64, 32]      # Decoder(sizes) -> MLP(sizes)

    key = jax.random.PRNGKey(0)
    kq, kr, kp = jax.random.split(key, 3)
    query_x = jax.random.normal(
        kq, (task_batch, query_set_size, feature_dim), jnp.float32
    )
    representation = jax.random.normal(kr, (task_batch, rep_dim), jnp.float32)
    params = init_params(kp, sizes)

    ref = decoder_reference(query_x, representation, params)

    # Default path: bf16 MXU operands, f32 accumulation/bias/ReLU.
    out = decoder_forward(query_x, representation, params)
    out = jax.block_until_ready(out)
    assert out.shape == (task_batch, query_set_size, sizes[-1])
    assert jnp.allclose(out, ref, atol=5e-2, rtol=5e-2)

    # Exact-parity path: f32 operands match the f32 reference tightly.
    out_f32 = decoder_forward(query_x, representation, params,
                              compute_dtype=jnp.float32)
    out_f32 = jax.block_until_ready(out_f32)
    assert out_f32.shape == (task_batch, query_set_size, sizes[-1])
    assert jnp.allclose(out_f32, ref, atol=1e-5, rtol=1e-5)

    print("KERNEL_OK")
</pallas_src>

<mosaic_0001>
module attributes {stable_mosaic.version = 11 : i64} {
  func.func @decoder_mlp_kernel(%arg0: i32, %arg1: i32, %arg2: memref<1x16x16xbf16, #tpu.memory_space<vmem>>, %arg3: memref<1x1x128xf32, #tpu.memory_space<vmem>>, %arg4: memref<16x128xbf16, #tpu.memory_space<vmem>>, %arg5: memref<128x128xbf16, #tpu.memory_space<vmem>>, %arg6: memref<1x128xf32, #tpu.memory_space<vmem>>, %arg7: memref<1x16x128xf32, #tpu.memory_space<vmem>>) attributes {dimension_semantics = [#tpu.dimension_semantics<parallel>, #tpu.dimension_semantics<parallel>], iteration_bounds = array<i64: 2, 1>, scalar_prefetch = 0 : i64, scratch_operands = 0 : i64, tpu.core_type = #tpu.core_type<tc>, window_params = [{transform_indices = @transform_0, window_bounds = array<i64: 1, 16, 16>}, {transform_indices = @transform_1, window_bounds = array<i64: 1, 1, 128>}, {pipeline_mode = #tpu.pipeline_mode<synchronous>, transform_indices = @transform_2, window_bounds = array<i64: 16, 128>}, {pipeline_mode = #tpu.pipeline_mode<synchronous>, transform_indices = @transform_3, window_bounds = array<i64: 128, 128>}, {pipeline_mode = #tpu.pipeline_mode<synchronous>, transform_indices = @transform_4, window_bounds = array<i64: 1, 128>}, {transform_indices = @transform_5, window_bounds = array<i64: 1, 16, 128>}]} {
    %c0 = arith.constant 0 : index
    %c0_0 = arith.constant 0 : index
    %c0_1 = arith.constant 0 : index
    %0 = vector.load %arg2[%c0, %c0_0, %c0_1] : memref<1x16x16xbf16, #tpu.memory_space<vmem>>, vector<1x16x16xbf16>
    %1 = vector.shape_cast %0 : vector<1x16x16xbf16> to vector<16x16xbf16>
    %c0_2 = arith.constant 0 : index
    %c0_3 = arith.constant 0 : index
    %2 = vector.load %arg4[%c0_2, %c0_3] : memref<16x128xbf16, #tpu.memory_space<vmem>>, vector<16x128xbf16>
    %cst = arith.constant dense<0.000000e+00> : vector<16x128xf32>
    %3 = tpu.matmul %1, %2, %cst {dimension_numbers = #tpu.dot_dimension_numbers<[1], [0], [0], [1], [0, 0, 1, 1], [], []>} : vector<16x16xbf16>, vector<16x128xbf16>, vector<16x128xf32> -> vector<16x128xf32>
    %4 = vector.shape_cast %3 : vector<16x128xf32> to vector<1x16x128xf32>
    %c0_4 = arith.constant 0 : index
    %c0_5 = arith.constant 0 : index
    %c0_6 = arith.constant 0 : index
    %5 = vector.load %arg3[%c0_4, %c0_5, %c0_6] : memref<1x1x128xf32, #tpu.memory_space<vmem>>, vector<1x1x128xf32>
    %6 = vector.broadcast %5 : vector<1x1x128xf32> to vector<1x16x128xf32>
    %7 = arith.addf %4, %6 : vector<1x16x128xf32>
    %cst_7 = arith.constant 0.000000e+00 : f32
    %8 = vector.broadcast %cst_7 : f32 to vector<1x16x128xf32>
    %9 = arith.maximumf %7, %8 : vector<1x16x128xf32>
    %10 = vector.shape_cast %9 : vector<1x16x128xf32> to vector<16x128xf32>
    %11 = arith.truncf %10 : vector<16x128xf32> to vector<16x128xbf16>
    %c0_8 = arith.constant 0 : index
    %c0_9 = arith.constant 0 : index
    %12 = vector.load %arg5[%c0_8, %c0_9] : memref<128x128xbf16, #tpu.memory_space<vmem>>, vector<128x128xbf16>
    %cst_10 = arith.constant dense<0.000000e+00> : vector<16x128xf32>
    %13 = tpu.matmul %11, %12, %cst_10 {dimension_numbers = #tpu.dot_dimension_numbers<[1], [0], [0], [1], [0, 0, 1, 1], [], []>} : vector<16x128xbf16>, vector<128x128xbf16>, vector<16x128xf32> -> vector<16x128xf32>
    %c0_11 = arith.constant 0 : index
    %c0_12 = arith.constant 0 : index
    %14 = vector.load %arg6[%c0_11, %c0_12] : memref<1x128xf32, #tpu.memory_space<vmem>>, vector<1x128xf32>
    %15 = vector.broadcast %14 : vector<1x128xf32> to vector<16x128xf32>
    %16 = arith.addf %13, %15 : vector<16x128xf32>
    %17 = vector.shape_cast %16 : vector<16x128xf32> to vector<1x16x128xf32>
    %c0_13 = arith.constant 0 : index
    %c0_14 = arith.constant 0 : index
    %c0_15 = arith.constant 0 : index
    %18 = vector.load %arg7[%c0_13, %c0_14, %c0_15] : memref<1x16x128xf32, #tpu.memory_space<vmem>>, vector<1x16x128xf32>
    tpu.vector_store %arg7[%c0_13, %c0_14, %c0_15], %17 {strides = array<i32>} : memref<1x16x128xf32, #tpu.memory_space<vmem>>, vector<1x16x128xf32>,
    return
  }
  func.func @transform_0(%arg0: i32, %arg1: i32) -> (i32, i32, i32) {
    %c0_i32 = arith.constant 0 : i32
    %c0_i32_0 = arith.constant 0 : i32
    return %arg0, %arg1, %c0_i32 : i32, i32, i32
  }
  func.func @transform_1(%arg0: i32, %arg1: i32) -> (i32, i32, i32) {
    %c0_i32 = arith.constant 0 : i32
    %c0_i32_0 = arith.constant 0 : i32
    %c0_i32_1 = arith.constant 0 : i32
    return %arg0, %c0_i32, %c0_i32_0 : i32, i32, i32
  }
  func.func @transform_2(%arg0: i32, %arg1: i32) -> (i32, i32) {
    %c0_i32 = arith.constant 0 : i32
    %c0_i32_0 = arith.constant 0 : i32
    %c0_i32_1 = arith.constant 0 : i32
    return %c0_i32, %c0_i32_0 : i32, i32
  }
  func.func @transform_3(%arg0: i32, %arg1: i32) -> (i32, i32) {
    %c0_i32 = arith.constant 0 : i32
    %c0_i32_0 = arith.constant 0 : i32
    %c0_i32_1 = arith.constant 0 : i32
    return %c0_i32, %c0_i32_0 : i32, i32
  }
  func.func @transform_4(%arg0: i32, %arg1: i32) -> (i32, i32) {
    %c0_i32 = arith.constant 0 : i32
    %c0_i32_0 = arith.constant 0 : i32
    %c0_i32_1 = arith.constant 0 : i32
    return %c0_i32, %c0_i32_0 : i32, i32
  }
  func.func @transform_5(%arg0: i32, %arg1: i32) -> (i32, i32, i32) {
    %c0_i32 = arith.constant 0 : i32
    %c0_i32_0 = arith.constant 0 : i32
    return %arg0, %arg1, %c0_i32 : i32, i32, i32
  }
}

</mosaic_0001>

<llo_original>
// kernel: tpu_custom_call.1
$region0: #{tpu_custom_call.1}
  #allocation0 [shape = 'u32[]', space=smem, size = 0x4, offset = 0x4, fixed_abs, tag = 'smem constant byte address 0x4 - core index']
  #allocation1 [shape = 'u32[144,128]{1,0:T(1,128)}', space=vmem, size = 0x12000, scoped, tag = 'internal scratch']
  %s0 = inlined_call_operand.hbm [shape: bf16[2,16,16], index: 0, kind: input, shape index: {}]
  %s1 = inlined_call_operand.hbm [shape: f32[2,1,128], index: 1, kind: input, shape index: {}]
  %s2 = inlined_call_operand.hbm [shape: bf16[16,128], index: 2, kind: input, shape index: {}]
  %s3 = inlined_call_operand.hbm [shape: bf16[128,128], index: 3, kind: input, shape index: {}]
  %s4 = inlined_call_operand.vmem [shape: f32[1,128], index: 4, kind: input, shape index: {}]
  %s5 = inlined_call_operand.hbm [shape: f32[2,16,128], index: 5, kind: output, shape index: {}]
  %s6 = sld [smem:[#allocation0]]
  $region69: #{tpu_custom_call.1} parent=0
    _
  %s8 = ssub.s32 1, %s6
  %s9 = scalar_select 0, %s8, %s6
  $region1: #{tpu_custom_call.1} parent=0
    #allocation2 [shape = 'u8[8192]{0}', space=vmem, size = 0x2000, scoped, tag = 'input window, operand 0']
    #allocation3 [shape = 's32[2]{0}', space=sflag, size = 0x8, scoped, tag = 'scoped memory for tpu_custom_call.1']
    #allocation4 [shape = 's32[2]{0}', space=sflag, size = 0x8, scoped, tag = 'scoped memory for tpu_custom_call.1']
    #allocation5 [shape = 'u8[1024]{0}', space=vmem, size = 0x400, scoped, tag = 'input window, operand 1']
    #allocation6 [shape = 's32[2]{0}', space=sflag, size = 0x8, scoped, tag = 'scoped memory for tpu_custom_call.1']
    #allocation7 [shape = 'u8[4096]{0}', space=vmem, size = 0x1000, scoped, tag = 'input window, operand 2, single buffered']
    #allocation8 [shape = 'u8[32768]{0}', space=vmem, size = 0x8000, scoped, tag = 'input window, operand 3, single buffered']
    #allocation9 [shape = 's32[1]{0}', space=sflag, size = 0x4, scoped, tag = 'scoped memory for tpu_custom_call.1']
    #allocation10 [shape = 'u8[16384]{0}', space=vmem, size = 0x4000, scoped, tag = 'output window, operand 0']
    %10 = vsyncpa [#allocation3], 0
    %s11 = scalar_lea.sflag [#allocation3], 1
    %12 = vsyncpa %s11, 0
    %13 = vsyncpa [#allocation6], 0
    %s14 = scalar_lea.sflag [#allocation6], 1
    %15 = vsyncpa %s14, 0
    %16 = vsyncpa [#allocation9], 0
    %17 = vsyncpa [#allocation4], 0
    %s18 = scalar_lea.sflag [#allocation4], 1
    %19 = vsyncpa %s18, 0
    loop: start=0, step=1, limit=4
    $region2: #{tpu_custom_call.1} parent=1 // loop_pre_header
      _
    $region3: #{tpu_custom_call.1} parent=1 // loop_header
      %s21 = sphi 0, %s25
      %p22 = scmp.ge.s32.totalorder %s21, 4
      %s28 = sphi 0, %s40
      %s29 = sphi 0, %s36
      %s30 = sphi 0, %s28
      %s31 = sphi 0, %s29
      %s32 = sphi 0, %s30
      %s33 = sphi 0, %s31
      %s45 = sphi 0, %s47
      %s48 = sphi 0, %s45
      %s49 = sphi 0, %s48
      %s65 = sphi 0, %s49
      %s71 = sphi 0, %s73
      %s74 = sphi 0, %s71
      %s75 = sphi 0, %s74
      %s91 = sphi 0, %s75
      %s95 = sphi 0, %s95
      %s97 = sphi 0, %s95
      %s98 = sphi 0, %s97
      %s112 = sphi 0, %s98
      %s116 = sphi 0, %s116
      %s118 = sphi 0, %s116
      %s119 = sphi 0, %s118
      %s133 = sphi 0, %s119
      %s137 = sphi 0, %s137
      %s139 = sphi 0, %s137
      %s140 = sphi 0, %s139
      %s154 = sphi 0, %s140
      %s162 = sphi 0, %s164
      %s165 = sphi 0, %s162
      %s166 = sphi 0, %s165
      %s182 = sphi 0, %s166
    $region4: #{tpu_custom_call.1} parent=1 // loop_header_branch
      %24 = sbr.rel (%p22) target = $region8
    $region5: #{tpu_custom_call.1} parent=1 // loop_body
      %s26 = ssub.s32 %s21, 1
      %s27 = ssub.s32 %s21, 2
      %s34 = sadd.s32 1, %s29
      %p35 = scmp.ge.s32.totalorder %s34, 1
      %s36 = scalar_select %p35, 0, %s34
      %s37 = sadd.s32 1, %s28
      %s38 = scalar_select %p35, %s37, %s28
      %p39 = scmp.ge.s32.totalorder %s38, 2
      %s40 = scalar_select %p39, 0, %s38
      %s41 = ssub.s32 %s28, %s40
      %s42 = ssub.s32 %s29, %s36
      %s43 = sor.u32 %s41, %s42
      %p44 = scmp.eq.s32.totalorder %s43, 0
      %s46 = sadd.s32 %s45, 1
      %s47 = scalar_select %p44, %s45, %s46
      %p50 = pneg %p44
      %p51 = scmp.eq.s32.totalorder %s21, 1
      %p52 = por %p50, %p51
      %p53 = scmp.ne.s32.totalorder %s45, %s48
      %p54 = scmp.eq.s32.totalorder %s21, 0
      %p55 = por %p53, %p54
      %p56 = scmp.ne.s32.totalorder %s45, %s48
      %p57 = scmp.eq.s32.totalorder %s26, 1
      %p58 = por %p56, %p57
      %p59 = scmp.ne.s32.totalorder %s48, %s49
      %p60 = scmp.eq.s32.totalorder %s26, 0
      %p61 = por %p59, %p60
      %p62 = scmp.ne.s32.totalorder %s48, %s49
      %p63 = scmp.eq.s32.totalorder %s27, 1
      %p64 = por %p62, %p63
      %p66 = scmp.ne.s32.totalorder %s49, %s65
      %p67 = scmp.eq.s32.totalorder %s27, 0
      %p68 = por %p66, %p67
      %s69 = ssub.s32 %s28, %s40
      %p70 = scmp.eq.s32.totalorder %s69, 0
      %s72 = sadd.s32 %s71, 1
      %s73 = scalar_select %p70, %s71, %s72
      %p76 = pneg %p70
      %p77 = scmp.eq.s32.totalorder %s21, 1
      %p78 = por %p76, %p77
      %p79 = scmp.ne.s32.totalorder %s71, %s74
      %p80 = scmp.eq.s32.totalorder %s21, 0
      %p81 = por %p79, %p80
      %p82 = scmp.ne.s32.totalorder %s71, %s74
      %p83 = scmp.eq.s32.totalorder %s26, 1
      %p84 = por %p82, %p83
      %p85 = scmp.ne.s32.totalorder %s74, %s75
      %p86 = scmp.eq.s32.totalorder %s26, 0
      %p87 = por %p85, %p86
      %p88 = scmp.ne.s32.totalorder %s74, %s75
      %p89 = scmp.eq.s32.totalorder %s27, 1
      %p90 = por %p88, %p89
      %p92 = scmp.ne.s32.totalorder %s75, %s91
      %p93 = scmp.eq.s32.totalorder %s27, 0
      %p94 = por %p92, %p93
      %s96 = sadd.s32 %s95, 1
      %p99 = scmp.eq.s32.totalorder %s21, 1
      %p100 = scmp.ne.s32.totalorder %s95, %s97
      %p101 = scmp.eq.s32.totalorder %s21, 0
      %p102 = por %p100, %p101
      %p103 = scmp.ne.s32.totalorder %s95, %s97
      %p104 = scmp.eq.s32.totalorder %s26, 1
      %p105 = por %p103, %p104
      %p106 = scmp.ne.s32.totalorder %s97, %s98
      %p107 = scmp.eq.s32.totalorder %s26, 0
      %p108 = por %p106, %p107
      %p109 = scmp.ne.s32.totalorder %s97, %s98
      %p110 = scmp.eq.s32.totalorder %s27, 1
      %p111 = por %p109, %p110
      %p113 = scmp.ne.s32.totalorder %s98, %s112
      %p114 = scmp.eq.s32.totalorder %s27, 0
      %p115 = por %p113, %p114
      %s117 = sadd.s32 %s116, 1
      %p120 = scmp.eq.s32.totalorder %s21, 1
      %p121 = scmp.ne.s32.totalorder %s116, %s118
      %p122 = scmp.eq.s32.totalorder %s21, 0
      %p123 = por %p121, %p122
      %p124 = scmp.ne.s32.totalorder %s116, %s118
      %p125 = scmp.eq.s32.totalorder %s26, 1
      %p126 = por %p124, %p125
      %p127 = scmp.ne.s32.totalorder %s118, %s119
      %p128 = scmp.eq.s32.totalorder %s26, 0
      %p129 = por %p127, %p128
      %p130 = scmp.ne.s32.totalorder %s118, %s119
      %p131 = scmp.eq.s32.totalorder %s27, 1
      %p132 = por %p130, %p131
      %p134 = scmp.ne.s32.totalorder %s119, %s133
      %p135 = scmp.eq.s32.totalorder %s27, 0
      %p136 = por %p134, %p135
      %s138 = sadd.s32 %s137, 1
      %p141 = scmp.eq.s32.totalorder %s21, 1
      %p142 = scmp.ne.s32.totalorder %s137, %s139
      %p143 = scmp.eq.s32.totalorder %s21, 0
      %p144 = por %p142, %p143
      %p145 = scmp.ne.s32.totalorder %s137, %s139
      %p146 = scmp.eq.s32.totalorder %s26, 1
      %p147 = por %p145, %p146
      %p148 = scmp.ne.s32.totalorder %s139, %s140
      %p149 = scmp.eq.s32.totalorder %s26, 0
      %p150 = por %p148, %p149
      %p151 = scmp.ne.s32.totalorder %s139, %s140
      %p152 = scmp.eq.s32.totalorder %s27, 1
      %p153 = por %p151, %p152
      %p155 = scmp.ne.s32.totalorder %s140, %s154
      %p156 = scmp.eq.s32.totalorder %s27, 0
      %p157 = por %p155, %p156
      %s158 = ssub.s32 %s28, %s40
      %s159 = ssub.s32 %s29, %s36
      %s160 = sor.u32 %s158, %s159
      %p161 = scmp.eq.s32.totalorder %s160, 0
      %s163 = sadd.s32 %s162, 1
      %s164 = scalar_select %p161, %s162, %s163
      %p167 = pneg %p161
      %p168 = scmp.eq.s32.totalorder %s21, 1
      %p169 = por %p167, %p168
      %p170 = scmp.ne.s32.totalorder %s162, %s165
      %p171 = scmp.eq.s32.totalorder %s21, 0
      %p172 = por %p170, %p171
      %p173 = scmp.ne.s32.totalorder %s162, %s165
      %p174 = scmp.eq.s32.totalorder %s26, 1
      %p175 = por %p173, %p174
      %p176 = scmp.ne.s32.totalorder %s165, %s166
      %p177 = scmp.eq.s32.totalorder %s26, 0
      %p178 = por %p176, %p177
      %p179 = scmp.ne.s32.totalorder %s165, %s166
      %p180 = scmp.eq.s32.totalorder %s27, 1
      %p181 = por %p179, %p180
      %p183 = scmp.ne.s32.totalorder %s166, %s182
      %p184 = scmp.eq.s32.totalorder %s27, 0
      %p185 = por %p183, %p184
      %p186 = scmp.le.s32.totalorder 1, %s21
      %p187 = scmp.lt.s32.totalorder %s21, 3
      %p188 = pnand %p186, %p187
      %p189 = pneg %p188
      // Predicated region
      $region9: #{tpu_custom_call.1} parent=5 // pred_check
        _
      $region10: #{tpu_custom_call.1} parent=5 // pred_check_branch
        %191 = sbr.rel (%p188) target = $region12
      $region11: #{tpu_custom_call.1} parent=5 // pred_region
        %s192 = ssub.s32 %s21, 1
        // Predicated region
        $region13: #{tpu_custom_call.1} parent=11 // pred_check
          %p193 = pneg %p108
        $region14: #{tpu_custom_call.1} parent=11 // pred_check_branch
          %195 = sbr.rel (%p193) target = $region16
        $region15: #{tpu_custom_call.1} parent=11 // pred_region
          %s197 = ssub.s32 128, 128
          %198 = vsyncadd [#allocation6], %s197
          %s199 = sshll.u32 [#allocation7], 4
          %s200 = int_to_ptr.vmem [resolvable:$true] %s199
          %205 = dma.hbm_to_vmem [thread:$0]  %s2, 128, %s200, [#allocation6], 64, 64, 4
        $region16: #{tpu_custom_call.1} parent=11 // pred_fallthru
          _
        // Predicated region
        $region17: #{tpu_custom_call.1} parent=11 // pred_check
          %p206 = pneg %p129
        $region18: #{tpu_custom_call.1} parent=11 // pred_check_branch
          %208 = sbr.rel (%p206) target = $region20
        $region19: #{tpu_custom_call.1} parent=11 // pred_region
          %s210 = ssub.s32 1024, 1024
          %211 = vsyncadd [#allocation9], %s210
          %s212 = sshll.u32 [#allocation8], 4
          %s213 = int_to_ptr.vmem [resolvable:$true] %s212
          %218 = dma.hbm_to_vmem [thread:$0]  %s3, 1024, %s213, [#allocation9], 64, 64, 4
        $region20: #{tpu_custom_call.1} parent=11 // pred_fallthru
          _
        // Predicated region
        $region21: #{tpu_custom_call.1} parent=11 // pred_check
          %p219 = pneg %p150
        $region22: #{tpu_custom_call.1} parent=11 // pred_check_branch
          %221 = sbr.rel (%p219) target = $region24
        $region23: #{tpu_custom_call.1} parent=11 // pred_region
          _
        $region24: #{tpu_custom_call.1} parent=11 // pred_fallthru
          _
      $region12: #{tpu_custom_call.1} parent=5 // pred_fallthru
        _
      %p222 = scmp.lt.s32.totalorder %s21, 2
      // Predicated region
      $region25: #{tpu_custom_call.1} parent=5 // pred_check
        %p223 = pneg %p222
      $region26: #{tpu_custom_call.1} parent=5 // pred_check_branch
        %225 = sbr.rel (%p223) target = $region28
      $region27: #{tpu_custom_call.1} parent=5 // pred_region
        // Predicated region
        $region29: #{tpu_custom_call.1} parent=27 // pred_check
          %p226 = pneg %p55
        $region30: #{tpu_custom_call.1} parent=27 // pred_check_branch
          %228 = sbr.rel (%p226) target = $region32
        $region31: #{tpu_custom_call.1} parent=27 // pred_region
          %s229 = sand.u32 %s45, 1
          %s230 = scalar_lea.sflag [#allocation3], %s229
          %s231 = sand.u32 %s45, 1
          %s232 = smul.addr %s231, 8
          %s233 = scalar_lea.vmem [#allocation2], %s232
          %s234 = smul.u32 2, %s29
          %s236 = ssub.s32 128, 128
          %237 = vsyncadd %s230, %s236
          %s238 = smul.addr %s28, 2
          %s239 = sadd.s32 %s234, %s238
          %s240 = smul.addr %s239, 64
          %s241 = scalar_lea.hbm %s0, %s240
          %s242 = sshll.u32 %s233, 4
          %s243 = int_to_ptr.vmem [resolvable:$true] %s242
          %248 = dma.hbm_to_vmem [thread:$0]  %s241, 128, %s243, %s230, 64, 64, 4
        $region32: #{tpu_custom_call.1} parent=27 // pred_fallthru
          _
        // Predicated region
        $region33: #{tpu_custom_call.1} parent=27 // pred_check
          %p249 = pneg %p81
        $region34: #{tpu_custom_call.1} parent=27 // pred_check_branch
          %251 = sbr.rel (%p249) target = $region36
        $region35: #{tpu_custom_call.1} parent=27 // pred_region
          %s252 = sand.u32 %s21, 1
          %s253 = scalar_lea.sflag [#allocation6], %s252
          %s254 = sand.u32 %s71, 1
          %s255 = scalar_lea.vmem [#allocation5], %s254
          %s257 = ssub.s32 16, 16
          %258 = vsyncadd %s253, %s257
          %s259 = smul.addr %s28, 16
          %s260 = scalar_lea.hbm %s1, %s259
          %s262 = sshll.u32 %s255, 4
          %s263 = int_to_ptr.vmem [resolvable:$true] %s262
          %265 = dma.hbm_to_vmem [thread:$0]  %s260, 16, %s263, %s253
        $region36: #{tpu_custom_call.1} parent=27 // pred_fallthru
          _
      $region28: #{tpu_custom_call.1} parent=5 // pred_fallthru
        _
      %p266 = scmp.le.s32.totalorder 1, %s21
      %p267 = scmp.lt.s32.totalorder %s21, 3
      %p268 = pnand %p266, %p267
      %p269 = pneg %p268
      // Predicated region
      $region37: #{tpu_custom_call.1} parent=5 // pred_check
        _
      $region38: #{tpu_custom_call.1} parent=5 // pred_check_branch
        %271 = sbr.rel (%p268) target = $region40
      $region39: #{tpu_custom_call.1} parent=5 // pred_region
        %s272 = ssub.s32 %s21, 1
        %s273 = sand.u32 %s48, 1
        %s274 = scalar_lea.sflag [#allocation3], %s273
        %s275 = sand.u32 %s48, 1
        %s276 = smul.addr %s275, 8
        %s277 = scalar_lea.vmem [#allocation2], %s276
        // Predicated region
        $region41: #{tpu_custom_call.1} parent=39 // pred_check
          %p278 = pneg %p61
        $region42: #{tpu_custom_call.1} parent=39 // pred_check_branch
          %280 = sbr.rel (%p278) target = $region44
        $region43: #{tpu_custom_call.1} parent=39 // pred_region
          %281 = dma.done %s274, 128
        $region44: #{tpu_custom_call.1} parent=39 // pred_fallthru
          _
        %s282 = sand.u32 %s26, 1
        %s283 = scalar_lea.sflag [#allocation6], %s282
        %s284 = sand.u32 %s74, 1
        %s285 = scalar_lea.vmem [#allocation5], %s284
        // Predicated region
        $region45: #{tpu_custom_call.1} parent=39 // pred_check
          %p286 = pneg %p87
        $region46: #{tpu_custom_call.1} parent=39 // pred_check_branch
          %288 = sbr.rel (%p286) target = $region48
        $region47: #{tpu_custom_call.1} parent=39 // pred_region
          %289 = dma.done %s283, 16
        $region48: #{tpu_custom_call.1} parent=39 // pred_fallthru
          _
        // Predicated region
        $region49: #{tpu_custom_call.1} parent=39 // pred_check
          %p290 = pneg %p108
        $region50: #{tpu_custom_call.1} parent=39 // pred_check_branch
          %292 = sbr.rel (%p290) target = $region52
        $region51: #{tpu_custom_call.1} parent=39 // pred_region
          %293 = dma.done [#allocation6], 128
        $region52: #{tpu_custom_call.1} parent=39 // pred_fallthru
          _
        // Predicated region
        $region53: #{tpu_custom_call.1} parent=39 // pred_check
          %p294 = pneg %p129
        $region54: #{tpu_custom_call.1} parent=39 // pred_check_branch
          %296 = sbr.rel (%p294) target = $region56
        $region55: #{tpu_custom_call.1} parent=39 // pred_region
          %297 = dma.done [#allocation9], 1024
        $region56: #{tpu_custom_call.1} parent=39 // pred_fallthru
          _
        %s298 = sand.u32 %s48, 1
        %s299 = scalar_lea.sflag [#allocation3], %s298
        %s300 = sand.u32 %s48, 1
        %s301 = smul.addr %s300, 8
        %s302 = scalar_lea.vmem [#allocation2], %s301
        %p303 = pneg %p61
        %p304 = pneg %p58
        %s305 = sand.u32 %s26, 1
        %s306 = scalar_lea.sflag [#allocation6], %s305
        %s307 = sand.u32 %s74, 1
        %s308 = scalar_lea.vmem [#allocation5], %s307
        %p309 = pneg %p87
        %p310 = pneg %p84
        %p311 = pneg %p108
        %p312 = pneg %p105
        %p313 = pneg %p129
        %p314 = pneg %p126
        %p315 = pneg %p150
        %p316 = pneg %p147
        %p317 = pneg %p178
        %p318 = pneg %p175
        %s319 = sand.u32 %s165, 1
        %s320 = scalar_lea.sflag [#allocation4], %s319
        %s321 = sand.u32 %s165, 1
        %s322 = smul.addr %s321, 16
        %s323 = scalar_lea.vmem [#allocation10], %s322
        %s324 = smul.u32 2, %s31
        %s325 = smul.u32 2, %s31
        %v327 = vld [vmem:[%s277] sm:$0xf]
        %v328 = vld [vmem:[%s277 + $0x4] sm:$0xf]
        %v329 = vld [vmem:[#allocation7] sm:$0xf]
        %v330 = vld [vmem:[#allocation7 + $0x4] sm:$0xf]
        %v333 = vunpack.c.l.b16 %v327
        %v334 = vunpack.c.l.b16 %v328
        %v335 = vpack.c.b16 %v334, %v333
        %v338 = vunpack.c.l.b16 %v329
        %v339 = vunpack.c.l.b16 %v330
        %v340 = vpack.c.b16 %v339, %v338
        %vm342 = vcmask 130048
        %v344 = vsel %vm342, %v335, 0
        %346 = vmatprep.subr.bf16.mxu0 0
        %347 = vmatpush1.bf16.msra.mxu0 0
        %348 = vmatprep.subr.bf16.mxu0 0
        %349 = vmatpush1.bf16.msra.mxu0 0
        %350 = vmatprep.subr.bf16.mxu0 0
        %351 = vmatpush1.bf16.msra.mxu0 0
        %352 = vmatprep.subr.bf16.mxu0 0
        %353 = vmatpush1.bf16.msra.mxu0 0
        %354 = vmatprep.subr.bf16.mxu0 0
        %355 = vmatpush1.bf16.msra.mxu0 0
        %356 = vmatprep.subr.bf16.mxu0 0
        %357 = vmatpush1.bf16.msra.mxu0 0
        %358 = vmatprep.subr.bf16.mxu0 0
        %359 = vmatpush1.bf16.msra.mxu0 0
        %360 = vmatprep.subr.bf16.mxu0 0
        %361 = vmatpush1.bf16.msra.mxu0 %v340
        %362 = vmatprep.subr.bf16.mxu0 0
        %363 = vmatpush2.bf16.msra.mxu0 0
        %364 = vmatprep.subr.bf16.mxu0 0
        %365 = vmatpush2.bf16.msra.mxu0 0
        %366 = vmatprep.subr.bf16.mxu0 0
        %367 = vmatpush2.bf16.msra.mxu0 0
        %368 = vmatprep.subr.bf16.mxu0 0
        %369 = vmatpush2.bf16.msra.mxu0 0
        %370 = vmatprep.subr.bf16.mxu0 0
        %371 = vmatpush2.bf16.msra.mxu0 0
        %372 = vmatprep.subr.bf16.mxu0 0
        %373 = vmatpush2.bf16.msra.mxu0 0
        %374 = vmatprep.subr.bf16.mxu0 0
        %375 = vmatpush2.bf16.msra.mxu0 0
        %376 = vmatprep.subr.bf16.mxu0 0
        %377 = vmatpush2.bf16.msra.mxu0 0
        %378 = vmatprep.mubr.bf16.mxu0 0
        %379 = vmatmul.mubr.bf16.gmra.mxu0 %v344
        %v380 = vpop.f32.mrf.mxu0
        %v381 = vadd.f32 0.0, %v380
        %v382 = vpop.f32.mrf.mxu0
        %v383 = vpop.f32.mrf.mxu0
        %v384 = vadd.f32 0.0, %v383
        %v385 = vpop.f32.mrf.mxu0
        %386 = vdwg.mxu0
        %v387 = vld [vmem:[%s285] sm:$0x1]
        %v389 = vlaneseq
        %v390 = vshrl.u32 %v389, 7
        %v391 = vsub.s32 0, %v390
        %v392 = vrot.slane %v387, %v391
        %v394 = vadd.f32 %v381, %v392
        %v395 = vadd.f32 %v384, %v392
        %v396 = vmax.f32 %v394, 0.0
        %v397 = vmax.f32 %v395, 0.0
        %v398 = vpack.c.bf16 %v397, %v396
        %v399 = vld [vmem:[#allocation8] sm:$0xf]
        %v400 = vld [vmem:[#allocation8 + $0x4] sm:$0xf]
        %v401 = vld [vmem:[#allocation8 + $0x8] sm:$0xf]
        %v402 = vld [vmem:[#allocation8 + $0xc] sm:$0xf]
        %v403 = vld [vmem:[#allocation8 + $0x10] sm:$0xf]
        %v404 = vld [vmem:[#allocation8 + $0x14] sm:$0xf]
        %v405 = vld [vmem:[#allocation8 + $0x18] sm:$0xf]
        %v406 = vld [vmem:[#allocation8 + $0x1c] sm:$0xf]
        %v407 = vld [vmem:[#allocation8 + $0x20] sm:$0xf]
        %v408 = vld [vmem:[#allocation8 + $0x24] sm:$0xf]
        %v409 = vld [vmem:[#allocation8 + $0x28] sm:$0xf]
        %v410 = vld [vmem:[#allocation8 + $0x2c] sm:$0xf]
        %v411 = vld [vmem:[#allocation8 + $0x30] sm:$0xf]
        %v412 = vld [vmem:[#allocation8 + $0x34] sm:$0xf]
        %v413 = vld [vmem:[#allocation8 + $0x38] sm:$0xf]
        %v414 = vld [vmem:[#allocation8 + $0x3c] sm:$0xf]
        %v415 = vld [vmem:[%s4] sm:$0x1]
        %v417 = vlaneseq
        %v418 = vshrl.u32 %v417, 7
        %v419 = vsub.s32 0, %v418
        %v420 = vrot.slane %v415, %v419
        %v438 = vunpack.c.l.b16 %v399
        %v439 = vunpack.c.l.b16 %v400
        %v440 = vunpack.c.l.b16 %v401
        %v441 = vunpack.c.l.b16 %v402
        %v442 = vunpack.c.l.b16 %v403
        %v443 = vunpack.c.l.b16 %v404
        %v444 = vunpack.c.l.b16 %v405
        %v445 = vunpack.c.l.b16 %v406
        %v446 = vunpack.c.l.b16 %v407
        %v447 = vunpack.c.l.b16 %v408
        %v448 = vunpack.c.l.b16 %v409
        %v449 = vunpack.c.l.b16 %v410
        %v450 = vunpack.c.l.b16 %v411
        %v451 = vunpack.c.l.b16 %v412
        %v452 = vunpack.c.l.b16 %v413
        %v453 = vunpack.c.l.b16 %v414
        %v454 = vpack.c.b16 %v439, %v438
        %v455 = vpack.c.b16 %v441, %v440
        %v456 = vpack.c.b16 %v443, %v442
        %v457 = vpack.c.b16 %v445, %v444
        %v458 = vpack.c.b16 %v447, %v446
        %v459 = vpack.c.b16 %v449, %v448
        %v460 = vpack.c.b16 %v451, %v450
        %v461 = vpack.c.b16 %v453, %v452
        %470 = vmatprep.subr.bf16.mxu0 0
        %471 = vmatpush1.bf16.msra.mxu0 %v461
        %472 = vmatprep.subr.bf16.mxu0 0
        %473 = vmatpush1.bf16.msra.mxu0 %v460
        %474 = vmatprep.subr.bf16.mxu0 0
        %475 = vmatpush1.bf16.msra.mxu0 %v459
        %476 = vmatprep.subr.bf16.mxu0 0
        %477 = vmatpush1.bf16.msra.mxu0 %v458
        %478 = vmatprep.subr.bf16.mxu0 0
        %479 = vmatpush1.bf16.msra.mxu0 %v457
        %480 = vmatprep.subr.bf16.mxu0 0
        %481 = vmatpush1.bf16.msra.mxu0 %v456
        %482 = vmatprep.subr.bf16.mxu0 0
        %483 = vmatpush1.bf16.msra.mxu0 %v455
        %484 = vmatprep.subr.bf16.mxu0 0
        %485 = vmatpush1.bf16.msra.mxu0 %v454
        %486 = vmatprep.subr.bf16.mxu0 0
        %487 = vmatpush2.bf16.msra.mxu0 0
        %488 = vmatprep.subr.bf16.mxu0 0
        %489 = vmatpush2.bf16.msra.mxu0 0
        %490 = vmatprep.subr.bf16.mxu0 0
        %491 = vmatpush2.bf16.msra.mxu0 0
        %492 = vmatprep.subr.bf16.mxu0 0
        %493 = vmatpush2.bf16.msra.mxu0 0
        %494 = vmatprep.subr.bf16.mxu0 0
        %495 = vmatpush2.bf16.msra.mxu0 0
        %496 = vmatprep.subr.bf16.mxu0 0
        %497 = vmatpush2.bf16.msra.mxu0 0
        %498 = vmatprep.subr.bf16.mxu0 0
        %499 = vmatpush2.bf16.msra.mxu0 0
        %500 = vmatprep.subr.bf16.mxu0 0
        %501 = vmatpush2.bf16.msra.mxu0 0
        %502 = vmatprep.mubr.bf16.mxu0 0
        %503 = vmatmul.mubr.bf16.gmra.mxu0 %v398
        %v504 = vpop.f32.mrf.mxu0
        %v505 = vadd.f32 %v420, %v504
        %v506 = vpop.f32.mrf.mxu0
        %v507 = vpop.f32.mrf.mxu0
        %v508 = vadd.f32 %v420, %v507
        %v509 = vpop.f32.mrf.mxu0
        %510 = vdwg.mxu0
        %511 = vst [vmem:[%s323] sm:$0xff] %v505
        %512 = vst [vmem:[%s323 + $0x8] sm:$0xff] %v508
        %s513 = sand.u32 %s165, 1
        %s514 = scalar_lea.sflag [#allocation4], %s513
        %s515 = sand.u32 %s165, 1
        %s516 = smul.addr %s515, 16
        %s517 = scalar_lea.vmem [#allocation10], %s516
        // Predicated region
        $region57: #{tpu_custom_call.1} parent=39 // pred_check
          %p518 = pneg %p175
        $region58: #{tpu_custom_call.1} parent=39 // pred_check_branch
          %520 = sbr.rel (%p518) target = $region60
        $region59: #{tpu_custom_call.1} parent=39 // pred_region
          %s521 = smul.u32 2, %s31
          %s523 = ssub.s32 256, 256
          %524 = vsyncadd %s514, %s523
          %s525 = smul.addr %s30, 2
          %s526 = sadd.s32 %s521, %s525
          %s527 = smul.addr %s526, 128
          %s528 = scalar_lea.hbm %s5, %s527
          %s529 = sshll.u32 %s517, 4
          %s530 = int_to_ptr.vmem [resolvable:$true] %s529
          %535 = dma.vmem_to_hbm [thread:$0]  %s530, 256, %s528, %s514, 128, 128, 8
        $region60: #{tpu_custom_call.1} parent=39 // pred_fallthru
          _
      $region40: #{tpu_custom_call.1} parent=5 // pred_fallthru
        _
      %p536 = scmp.le.s32.totalorder 2, %s21
      // Predicated region
      $region61: #{tpu_custom_call.1} parent=5 // pred_check
        %p537 = pneg %p536
      $region62: #{tpu_custom_call.1} parent=5 // pred_check_branch
        %539 = sbr.rel (%p537) target = $region64
      $region63: #{tpu_custom_call.1} parent=5 // pred_region
        %s540 = ssub.s32 %s21, 2
        // Predicated region
        $region65: #{tpu_custom_call.1} parent=63 // pred_check
          %p541 = pneg %p181
        $region66: #{tpu_custom_call.1} parent=63 // pred_check_branch
          %543 = sbr.rel (%p541) target = $region68
        $region67: #{tpu_custom_call.1} parent=63 // pred_region
          %s544 = sand.u32 %s166, 1
          %s545 = scalar_lea.sflag [#allocation4], %s544
          %s546 = sand.u32 %s166, 1
          %s547 = smul.addr %s546, 16
          %s548 = scalar_lea.vmem [#allocation10], %s547
          %549 = dma.done %s545, 256
        $region68: #{tpu_custom_call.1} parent=63 // pred_fallthru
          _
      $region64: #{tpu_custom_call.1} parent=5 // pred_fallthru
        _
    $region6: #{tpu_custom_call.1} parent=1 // loop_footer
      %s25 = sadd.s32 1, %s21
    $region7: #{tpu_custom_call.1} parent=1 // loop_footer_branch
      %20 = sbr.rel target = $region3
    $region8: #{tpu_custom_call.1} parent=1 // loop_exit
      _
    %550 = vsyncpa [#allocation3], 1
    %s551 = scalar_lea.sflag [#allocation3], 1
    %552 = vsyncpa %s551, 1
    %553 = vsyncpa [#allocation6], 1
    %s554 = scalar_lea.sflag [#allocation6], 1
    %555 = vsyncpa %s554, 1
    %556 = vsyncpa [#allocation9], 1
    %557 = vsyncpa [#allocation4], 1
    %s558 = scalar_lea.sflag [#allocation4], 1
    %559 = vsyncpa %s558, 1

</llo_original>
